<compile_context>
chip_gen: v5e
topology: v5e:2x2
jax: 0.10.0
libtpu: 0.0.40
codegen_flags: <defaults>
</compile_context>

<pallas_src>
import jax
import jax.numpy as jnp
from jax.experimental import pallas as pl
from jax.experimental.pallas import tpu as pltpu


# ---------------------------------------------------------------------------
# Kernels
# ---------------------------------------------------------------------------
def _critic_kernel_fused(s_ref, a_ref, w1s_ref, w1a_ref, b1_ref,
                         w2_ref, b2_ref, w3_ref, b3_ref, q_ref):
    """Both Q-nets lane-packed (2H <= 128): block-diagonal layer 2."""
    wdt = w1s_ref.dtype
    s = s_ref[...].astype(wdt)
    a = a_ref[...].astype(wdt)
    # layer 1: s@W1_s + a@W1_a + b1  (concat folded into two dots)
    h = (jnp.dot(s, w1s_ref[...], preferred_element_type=jnp.float32)
         + jnp.dot(a, w1a_ref[...], preferred_element_type=jnp.float32)
         + b1_ref[...])
    h = jnp.maximum(h, 0.0)
    # layer 2: block-diagonal (free when 2H <= 128 lanes)
    h = jnp.dot(h.astype(wdt), w2_ref[...],
                preferred_element_type=jnp.float32) + b2_ref[...]
    h = jnp.maximum(h, 0.0)
    # layer 3: [2H, 2] head (q1 in column 0, q2 in column 1)
    q_ref[...] = (jnp.dot(h.astype(wdt), w3_ref[...],
                          preferred_element_type=jnp.float32) + b3_ref[...])


def _critic_kernel_split(s_ref, a_ref,
                         w1s1_ref, w1a1_ref, b11_ref, w21_ref, b21_ref, w31_ref,
                         w1s2_ref, w1a2_ref, b12_ref, w22_ref, b22_ref, w32_ref,
                         b3_ref, q_ref):
    """Large hidden dim: two independent HxH paths (no zero-block MXU work)."""
    wdt = w1s1_ref.dtype
    s = s_ref[...].astype(wdt)
    a = a_ref[...].astype(wdt)

    h1 = (jnp.dot(s, w1s1_ref[...], preferred_element_type=jnp.float32)
          + jnp.dot(a, w1a1_ref[...], preferred_element_type=jnp.float32)
          + b11_ref[...])
    h1 = jnp.maximum(h1, 0.0)
    h1 = jnp.dot(h1.astype(wdt), w21_ref[...],
                 preferred_element_type=jnp.float32) + b21_ref[...]
    h1 = jnp.maximum(h1, 0.0)

    h2 = (jnp.dot(s, w1s2_ref[...], preferred_element_type=jnp.float32)
          + jnp.dot(a, w1a2_ref[...], preferred_element_type=jnp.float32)
          + b12_ref[...])
    h2 = jnp.maximum(h2, 0.0)
    h2 = jnp.dot(h2.astype(wdt), w22_ref[...],
                 preferred_element_type=jnp.float32) + b22_ref[...]
    h2 = jnp.maximum(h2, 0.0)

    # layer 3: each head maps to one column of the [tb, 2] slab (other column
    # of its weight is zero), summed -> exact and lane-packed.
    q_ref[...] = (jnp.dot(h1.astype(wdt), w31_ref[...],
                          preferred_element_type=jnp.float32)
                  + jnp.dot(h2.astype(wdt), w32_ref[...],
                            preferred_element_type=jnp.float32)
                  + b3_ref[...])


# ---------------------------------------------------------------------------
# Wrapper helpers
# ---------------------------------------------------------------------------
_DEFAULT_VMEM_BUDGET = 36 * 2**20  # conservative working set (fits v7x 64 MiB)


def _round_up(x, m):
    return ((x + m - 1) // m) * m


def _cdiv(a, b):
    return -(-a // b)


def _padded_bytes(shape, dtype):
    r, c = shape
    return _round_up(r, 8) * _round_up(c, 128) * jnp.dtype(dtype).itemsize


def _vmem_estimate(tb, n_states, n_actions, H, weights, weight_bufs):
    f32 = jnp.float32
    act = (2 * _padded_bytes((tb, n_states), f32)      # states (double-buffered)
           + 2 * _padded_bytes((tb, n_actions), f32)   # actions
           + 2 * _padded_bytes((tb, 2), f32))          # q output
    inter = 3 * _padded_bytes((tb, 2 * H), f32)        # h intermediates + slack
    wbytes = weight_bufs * sum(_padded_bytes(w.shape, w.dtype) for w in weights)
    return act + inter + wbytes


def critic_forward(states, actions, params, *, batch_tile=512,
                   vmem_budget_bytes=_DEFAULT_VMEM_BUDGET):
    """Fused dual-Q forward.

    Returns one lane-packed [B, 2] slab: column 0 = q1, column 1 = q2.
    Split the heads only where they are consumed (keeps the output lane-dense
    and avoids two extra tiny XLA slice ops per call).
    """
    B, n_states = states.shape
    n_actions = actions.shape[1]
    mode, H, weights = params["mode"], params["H"], params["weights"]
    kernel = _critic_kernel_fused if mode == "fused" else _critic_kernel_split

    # ---- batch-tile selection --------------------------------------------
    tb_cap = max(8, _round_up(int(batch_tile), 8))
    # Shrink the tile until the working set fits the VMEM budget (weights
    # counted double-buffered so the estimate is safe either way).
    while tb_cap > 8 and _vmem_estimate(tb_cap, n_states, n_actions, H,
                                        weights, 2) > vmem_budget_bytes:
        tb_cap = max(8, _round_up(tb_cap // 2, 8))

    n_tiles = max(1, _cdiv(B, tb_cap))
    if n_tiles == 1 and B >= 16:
        # Give the grid >= 2 steps so v7x can shard the batch across its two
        # TensorCores; one extra grid step (~0.35 us) is noise elsewhere.
        n_tiles = 2
    tb = _round_up(_cdiv(B, n_tiles), 8)
    b_pad = n_tiles * tb

    if b_pad != B:
        pad = ((0, b_pad - B), (0, 0))
        states = jnp.pad(states, pad)
        actions = jnp.pad(actions, pad)

    est = _vmem_estimate(tb, n_states, n_actions, H, weights, 2)
    vmem_limit = None
    if est > 16 * 2**20:            # above the smallest (v5e) scoped default
        vmem_limit = min(int(est * 5 // 4), 48 * 2**20)
    compiler_params = pltpu.CompilerParams(
        dimension_semantics=("parallel",),
        vmem_limit_bytes=vmem_limit,
    )

    def build(single_buffer_weights):
        def const_spec(arr):
            ndim = arr.ndim
            kwargs = dict(memory_space=pltpu.VMEM)
            if single_buffer_weights:
                # Constant index_map => never re-fetched; one buffer suffices.
                kwargs["pipeline_mode"] = pl.Buffered(1)
            return pl.BlockSpec(arr.shape, lambda i: (0,) * ndim, **kwargs)

        in_specs = [
            pl.BlockSpec((tb, n_states), lambda i: (i, 0),
                         memory_space=pltpu.VMEM),
            pl.BlockSpec((tb, n_actions), lambda i: (i, 0),
                         memory_space=pltpu.VMEM),
        ] + [const_spec(w) for w in weights]

        return pl.pallas_call(
            kernel,
            out_shape=jax.ShapeDtypeStruct((b_pad, 2), jnp.float32),
            grid=(n_tiles,),
            in_specs=in_specs,
            out_specs=pl.BlockSpec((tb, 2), lambda i: (i, 0),
                                   memory_space=pltpu.VMEM),
            compiler_params=compiler_params,
        )

    args = (states, actions, *weights)
    try:
        q = build(single_buffer_weights=True)(*args)
    except Exception:  # older jax without BlockSpec pipeline_mode -> 2 buffers
        q = build(single_buffer_weights=False)(*args)

    return q[:B]


# ---------------------------------------------------------------------------
# Parameter packing / init (matches weights_init_: xavier_uniform, zero bias).
# Per-net weights stored as [in, out] so the kernel computes y = x @ W + b.
# ---------------------------------------------------------------------------
def pack_critic_params(net1, net2, n_states, *, weight_dtype=jnp.float32):
    """Pack the two Q-nets for the kernel.  weight_dtype=bf16 is recommended
    for large hidden_dim on v6e/v7x (keep f32 on v5e)."""
    w1_1, b1_1, w2_1, b2_1, w3_1, b3_1 = net1
    w1_2, b1_2, w2_2, b2_2, w3_2, b3_2 = net2
    H = w2_1.shape[0]
    cast = lambda w: w.astype(weight_dtype)
    f32 = lambda b: b.astype(jnp.float32)
    b3 = f32(jnp.concatenate([b3_1, b3_2], axis=1))               # [1, 2]

    if 2 * H <= 128:
        # Fused lane-packed form: the zero blocks sit in lanes that are padded
        # to 128 anyway, so they are free.
        w1s = jnp.concatenate([w1_1[:n_states], w1_2[:n_states]], axis=1)
        w1a = jnp.concatenate([w1_1[n_states:], w1_2[n_states:]], axis=1)
        b1 = jnp.concatenate([b1_1, b1_2], axis=1)
        z = jnp.zeros((H, H), jnp.float32)
        w2 = jnp.block([[w2_1, z], [z, w2_2]])                    # [2H, 2H]
        b2 = jnp.concatenate([b2_1, b2_2], axis=1)
        z1 = jnp.zeros((H, 1), jnp.float32)
        w3 = jnp.block([[w3_1, z1], [z1, w3_2]])                  # [2H, 2]
        weights = (cast(w1s), cast(w1a), f32(b1),
                   cast(w2), f32(b2), cast(w3), b3)
        return {"mode": "fused", "H": H, "weights": weights}

    # Split form for large H: two independent paths, heads packed into [H, 2]
    # weights whose unused column is zero (exact).
    z1 = jnp.zeros((H, 1), jnp.float32)
    w3_1p = jnp.concatenate([w3_1, z1], axis=1)                   # col 1 = 0
    w3_2p = jnp.concatenate([z1, w3_2], axis=1)                   # col 0 = 0
    weights = (
        cast(w1_1[:n_states]), cast(w1_1[n_states:]), f32(b1_1),
        cast(w2_1), f32(b2_1), cast(w3_1p),
        cast(w1_2[:n_states]), cast(w1_2[n_states:]), f32(b1_2),
        cast(w2_2), f32(b2_2), cast(w3_2p),
        b3,
    )
    return {"mode": "split", "H": H, "weights": weights}


def xavier_uniform(key, fan_in, fan_out):
    bound = float(jnp.sqrt(6.0 / (fan_in + fan_out)))
    return jax.random.uniform(key, (fan_in, fan_out), jnp.float32, -bound, bound)


def init_one_net(key, n_in, hidden_dim):
    k1, k2, k3 = jax.random.split(key, 3)
    return (xavier_uniform(k1, n_in, hidden_dim),
            jnp.zeros((1, hidden_dim), jnp.float32),
            xavier_uniform(k2, hidden_dim, hidden_dim),
            jnp.zeros((1, hidden_dim), jnp.float32),
            xavier_uniform(k3, hidden_dim, 1),
            jnp.zeros((1, 1), jnp.float32))


# ---------------------------------------------------------------------------
# Pure-JAX reference (mirrors the PyTorch module exactly).
# ---------------------------------------------------------------------------
def critic_reference(states, actions, net1, net2):
    x = jnp.concatenate([states, actions], axis=1)

    def mlp(p):
        w1, b1, w2, b2, w3, b3 = p
        h = jnp.maximum(x @ w1 + b1, 0.0)
        h = jnp.maximum(h @ w2 + b2, 0.0)
        return h @ w3 + b3

    return mlp(net1), mlp(net2)


# ---------------------------------------------------------------------------
if __name__ == "__main__":
    key = jax.random.PRNGKey(0)
    k_case1, k_case2 = jax.random.split(key)

    def make_case(case_key, n_states, n_actions, hidden_dim, batch):
        k1, k2, kb, ks, ka = jax.random.split(case_key, 5)
        n_in = n_states + n_actions
        net1 = init_one_net(k1, n_in, hidden_dim)
        net2 = init_one_net(k2, n_in, hidden_dim)

        # weights_init_ zeroes the biases; perturb them here so the test also
        # exercises the fused bias wiring (forward must work for any params).
        def perturb(net, k):
            w1, b1, w2, b2, w3, b3 = net
            kk = jax.random.split(k, 3)
            return (w1, 0.1 * jax.random.normal(kk[0], b1.shape, jnp.float32),
                    w2, 0.1 * jax.random.normal(kk[1], b2.shape, jnp.float32),
                    w3, 0.1 * jax.random.normal(kk[2], b3.shape, jnp.float32))

        kb1, kb2 = jax.random.split(kb)
        net1, net2 = perturb(net1, kb1), perturb(net2, kb2)
        states = jax.random.normal(ks, (batch, n_states), jnp.float32)
        actions = jax.random.normal(ka, (batch, n_actions), jnp.float32)
        return net1, net2, states, actions

    # --- case 1: small hidden dim -> fused (block-diagonal) path -----------
    net1, net2, states, actions = make_case(k_case1, 8, 4, 32, 2)
    packed = pack_critic_params(net1, net2, n_states=8)
    q = critic_forward(states, actions, packed)
    jax.block_until_ready(q)
    q1, q2 = q[:, 0:1], q[:, 1:2]          # split at the consumption point
    r1, r2 = critic_reference(states, actions, net1, net2)
    assert q1.shape == (2, 1) and q2.shape == (2, 1)
    assert jnp.allclose(q1, r1, atol=1e-4, rtol=1e-4), "fused path q1 mismatch"
    assert jnp.allclose(q2, r2, atol=1e-4, rtol=1e-4), "fused path q2 mismatch"

    # --- case 2: larger hidden dim -> split per-net path, uneven batch ------
    net1b, net2b, states_b, actions_b = make_case(k_case2, 8, 4, 256, 25)
    packed_b = pack_critic_params(net1b, net2b, n_states=8)
    qb = critic_forward(states_b, actions_b, packed_b, batch_tile=512)
    jax.block_until_ready(qb)
    r1b, r2b = critic_reference(states_b, actions_b, net1b, net2b)
    assert qb.shape == (25, 2)
    assert jnp.allclose(qb[:, 0:1], r1b, atol=1e-3, rtol=1e-3), "split q1 mismatch"
    assert jnp.allclose(qb[:, 1:2], r2b, atol=1e-3, rtol=1e-3), "split q2 mismatch"

    # --- case 3: bf16 weights (v6e/v7x policy) vs the validated f32 kernel --
    packed_bf16 = pack_critic_params(net1, net2, n_states=8,
                                     weight_dtype=jnp.bfloat16)
    q_bf16 = critic_forward(states, actions, packed_bf16)
    jax.block_until_ready(q_bf16)
    assert jnp.allclose(q_bf16, q, atol=3e-2, rtol=3e-2), "bf16 path mismatch"

    print("KERNEL_OK")
</pallas_src>

<mosaic_0001>
module attributes {stable_mosaic.version = 11 : i64} {
  func.func @_critic_kernel_fused(%arg0: i32, %arg1: memref<8x8xf32, #tpu.memory_space<vmem>>, %arg2: memref<8x4xf32, #tpu.memory_space<vmem>>, %arg3: memref<8x64xf32, #tpu.memory_space<vmem>>, %arg4: memref<4x64xf32, #tpu.memory_space<vmem>>, %arg5: memref<1x64xf32, #tpu.memory_space<vmem>>, %arg6: memref<64x64xf32, #tpu.memory_space<vmem>>, %arg7: memref<1x64xf32, #tpu.memory_space<vmem>>, %arg8: memref<64x2xf32, #tpu.memory_space<vmem>>, %arg9: memref<1x2xf32, #tpu.memory_space<vmem>>, %arg10: memref<8x2xf32, #tpu.memory_space<vmem>>) attributes {dimension_semantics = [#tpu.dimension_semantics<parallel>], iteration_bounds = array<i64: 1>, scalar_prefetch = 0 : i64, scratch_operands = 0 : i64, tpu.core_type = #tpu.core_type<tc>, window_params = [{transform_indices = @transform_0, window_bounds = array<i64: 8, 8>}, {transform_indices = @transform_1, window_bounds = array<i64: 8, 4>}, {pipeline_mode = #tpu.pipeline_mode<synchronous>, transform_indices = @transform_2, window_bounds = array<i64: 8, 64>}, {pipeline_mode = #tpu.pipeline_mode<synchronous>, transform_indices = @transform_3, window_bounds = array<i64: 4, 64>}, {pipeline_mode = #tpu.pipeline_mode<synchronous>, transform_indices = @transform_4, window_bounds = array<i64: 1, 64>}, {pipeline_mode = #tpu.pipeline_mode<synchronous>, transform_indices = @transform_5, window_bounds = array<i64: 64, 64>}, {pipeline_mode = #tpu.pipeline_mode<synchronous>, transform_indices = @transform_6, window_bounds = array<i64: 1, 64>}, {pipeline_mode = #tpu.pipeline_mode<synchronous>, transform_indices = @transform_7, window_bounds = array<i64: 64, 2>}, {pipeline_mode = #tpu.pipeline_mode<synchronous>, transform_indices = @transform_8, window_bounds = array<i64: 1, 2>}, {transform_indices = @transform_9, window_bounds = array<i64: 8, 2>}]} {
    %c0 = arith.constant 0 : index
    %c0_0 = arith.constant 0 : index
    %0 = vector.load %arg1[%c0, %c0_0] : memref<8x8xf32, #tpu.memory_space<vmem>>, vector<8x8xf32>
    %c0_1 = arith.constant 0 : index
    %c0_2 = arith.constant 0 : index
    %1 = vector.load %arg2[%c0_1, %c0_2] : memref<8x4xf32, #tpu.memory_space<vmem>>, vector<8x4xf32>
    %c0_3 = arith.constant 0 : index
    %c0_4 = arith.constant 0 : index
    %2 = vector.load %arg3[%c0_3, %c0_4] : memref<8x64xf32, #tpu.memory_space<vmem>>, vector<8x64xf32>
    %cst = arith.constant dense<0.000000e+00> : vector<8x64xf32>
    %3 = tpu.matmul %0, %2, %cst {dimension_numbers = #tpu.dot_dimension_numbers<[1], [0], [0], [1], [0, 0, 1, 1], [], []>} : vector<8x8xf32>, vector<8x64xf32>, vector<8x64xf32> -> vector<8x64xf32>
    %c0_5 = arith.constant 0 : index
    %c0_6 = arith.constant 0 : index
    %4 = vector.load %arg4[%c0_5, %c0_6] : memref<4x64xf32, #tpu.memory_space<vmem>>, vector<4x64xf32>
    %cst_7 = arith.constant dense<0.000000e+00> : vector<8x64xf32>
    %5 = tpu.matmul %1, %4, %cst_7 {dimension_numbers = #tpu.dot_dimension_numbers<[1], [0], [0], [1], [0, 0, 1, 1], [], []>} : vector<8x4xf32>, vector<4x64xf32>, vector<8x64xf32> -> vector<8x64xf32>
    %6 = arith.addf %3, %5 : vector<8x64xf32>
    %c0_8 = arith.constant 0 : index
    %c0_9 = arith.constant 0 : index
    %7 = vector.load %arg5[%c0_8, %c0_9] : memref<1x64xf32, #tpu.memory_space<vmem>>, vector<1x64xf32>
    %8 = vector.broadcast %7 : vector<1x64xf32> to vector<8x64xf32>
    %9 = arith.addf %6, %8 : vector<8x64xf32>
    %cst_10 = arith.constant 0.000000e+00 : f32
    %10 = vector.broadcast %cst_10 : f32 to vector<8x64xf32>
    %11 = arith.maximumf %9, %10 : vector<8x64xf32>
    %c0_11 = arith.constant 0 : index
    %c0_12 = arith.constant 0 : index
    %12 = vector.load %arg6[%c0_11, %c0_12] : memref<64x64xf32, #tpu.memory_space<vmem>>, vector<64x64xf32>
    %cst_13 = arith.constant dense<0.000000e+00> : vector<8x64xf32>
    %13 = tpu.matmul %11, %12, %cst_13 {dimension_numbers = #tpu.dot_dimension_numbers<[1], [0], [0], [1], [0, 0, 1, 1], [], []>} : vector<8x64xf32>, vector<64x64xf32>, vector<8x64xf32> -> vector<8x64xf32>
    %c0_14 = arith.constant 0 : index
    %c0_15 = arith.constant 0 : index
    %14 = vector.load %arg7[%c0_14, %c0_15] : memref<1x64xf32, #tpu.memory_space<vmem>>, vector<1x64xf32>
    %15 = vector.broadcast %14 : vector<1x64xf32> to vector<8x64xf32>
    %16 = arith.addf %13, %15 : vector<8x64xf32>
    %cst_16 = arith.constant 0.000000e+00 : f32
    %17 = vector.broadcast %cst_16 : f32 to vector<8x64xf32>
    %18 = arith.maximumf %16, %17 : vector<8x64xf32>
    %c0_17 = arith.constant 0 : index
    %c0_18 = arith.constant 0 : index
    %19 = vector.load %arg8[%c0_17, %c0_18] : memref<64x2xf32, #tpu.memory_space<vmem>>, vector<64x2xf32>
    %cst_19 = arith.constant dense<0.000000e+00> : vector<8x2xf32>
    %20 = tpu.matmul %18, %19, %cst_19 {dimension_numbers = #tpu.dot_dimension_numbers<[1], [0], [0], [1], [0, 0, 1, 1], [], []>} : vector<8x64xf32>, vector<64x2xf32>, vector<8x2xf32> -> vector<8x2xf32>
    %c0_20 = arith.constant 0 : index
    %c0_21 = arith.constant 0 : index
    %21 = vector.load %arg9[%c0_20, %c0_21] : memref<1x2xf32, #tpu.memory_space<vmem>>, vector<1x2xf32>
    %22 = vector.broadcast %21 : vector<1x2xf32> to vector<8x2xf32>
    %23 = arith.addf %20, %22 : vector<8x2xf32>
    %c0_22 = arith.constant 0 : index
    %c0_23 = arith.constant 0 : index
    %24 = vector.load %arg10[%c0_22, %c0_23] : memref<8x2xf32, #tpu.memory_space<vmem>>, vector<8x2xf32>
    tpu.vector_store %arg10[%c0_22, %c0_23], %23 {strides = array<i32>} : memref<8x2xf32, #tpu.memory_space<vmem>>, vector<8x2xf32>,
    return
  }
  func.func @transform_0(%arg0: i32) -> (i32, i32) {
    %c0_i32 = arith.constant 0 : i32
    %c0_i32_0 = arith.constant 0 : i32
    return %arg0, %c0_i32 : i32, i32
  }
  func.func @transform_1(%arg0: i32) -> (i32, i32) {
    %c0_i32 = arith.constant 0 : i32
    %c0_i32_0 = arith.constant 0 : i32
    return %arg0, %c0_i32 : i32, i32
  }
  func.func @transform_2(%arg0: i32) -> (i32, i32) {
    %c0_i32 = arith.constant 0 : i32
    %c0_i32_0 = arith.constant 0 : i32
    %c0_i32_1 = arith.constant 0 : i32
    return %c0_i32, %c0_i32_0 : i32, i32
  }
  func.func @transform_3(%arg0: i32) -> (i32, i32) {
    %c0_i32 = arith.constant 0 : i32
    %c0_i32_0 = arith.constant 0 : i32
    %c0_i32_1 = arith.constant 0 : i32
    return %c0_i32, %c0_i32_0 : i32, i32
  }
  func.func @transform_4(%arg0: i32) -> (i32, i32) {
    %c0_i32 = arith.constant 0 : i32
    %c0_i32_0 = arith.constant 0 : i32
    %c0_i32_1 = arith.constant 0 : i32
    return %c0_i32, %c0_i32_0 : i32, i32
  }
  func.func @transform_5(%arg0: i32) -> (i32, i32) {
    %c0_i32 = arith.constant 0 : i32
    %c0_i32_0 = arith.constant 0 : i32
    %c0_i32_1 = arith.constant 0 : i32
    return %c0_i32, %c0_i32_0 : i32, i32
  }
  func.func @transform_6(%arg0: i32) -> (i32, i32) {
    %c0_i32 = arith.constant 0 : i32
    %c0_i32_0 = arith.constant 0 : i32
    %c0_i32_1 = arith.constant 0 : i32
    return %c0_i32, %c0_i32_0 : i32, i32
  }
  func.func @transform_7(%arg0: i32) -> (i32, i32) {
    %c0_i32 = arith.constant 0 : i32
    %c0_i32_0 = arith.constant 0 : i32
    %c0_i32_1 = arith.constant 0 : i32
    return %c0_i32, %c0_i32_0 : i32, i32
  }
  func.func @transform_8(%arg0: i32) -> (i32, i32) {
    %c0_i32 = arith.constant 0 : i32
    %c0_i32_0 = arith.constant 0 : i32
    %c0_i32_1 = arith.constant 0 : i32
    return %c0_i32, %c0_i32_0 : i32, i32
  }
  func.func @transform_9(%arg0: i32) -> (i32, i32) {
    %c0_i32 = arith.constant 0 : i32
    %c0_i32_0 = arith.constant 0 : i32
    return %arg0, %c0_i32 : i32, i32
  }
}

module attributes {stable_mosaic.version = 11 : i64} {
  func.func @_critic_kernel_fused(%arg0: i32, %arg1: memref<8x8xf32, #tpu.memory_space<vmem>>, %arg2: memref<8x4xf32, #tpu.memory_space<vmem>>, %arg3: memref<8x64xf32, #tpu.memory_space<vmem>>, %arg4: memref<4x64xf32, #tpu.memory_space<vmem>>, %arg5: memref<1x64xf32, #tpu.memory_space<vmem>>, %arg6: memref<64x64xf32, #tpu.memory_space<vmem>>, %arg7: memref<1x64xf32, #tpu.memory_space<vmem>>, %arg8: memref<64x2xf32, #tpu.memory_space<vmem>>, %arg9: memref<1x2xf32, #tpu.memory_space<vmem>>, %arg10: memref<8x2xf32, #tpu.memory_space<vmem>>) attributes {dimension_semantics = [#tpu.dimension_semantics<parallel>], iteration_bounds = array<i64: 1>, scalar_prefetch = 0 : i64, scratch_operands = 0 : i64, tpu.core_type = #tpu.core_type<tc>, window_params = [{transform_indices = @transform_0, window_bounds = array<i64: 8, 8>}, {transform_indices = @transform_1, window_bounds = array<i64: 8, 4>}, {pipeline_mode = #tpu.pipeline_mode<synchronous>, transform_indices = @transform_2, window_bounds = array<i64: 8, 64>}, {pipeline_mode = #tpu.pipeline_mode<synchronous>, transform_indices = @transform_3, window_bounds = array<i64: 4, 64>}, {pipeline_mode = #tpu.pipeline_mode<synchronous>, transform_indices = @transform_4, window_bounds = array<i64: 1, 64>}, {pipeline_mode = #tpu.pipeline_mode<synchronous>, transform_indices = @transform_5, window_bounds = array<i64: 64, 64>}, {pipeline_mode = #tpu.pipeline_mode<synchronous>, transform_indices = @transform_6, window_bounds = array<i64: 1, 64>}, {pipeline_mode = #tpu.pipeline_mode<synchronous>, transform_indices = @transform_7, window_bounds = array<i64: 64, 2>}, {pipeline_mode = #tpu.pipeline_mode<synchronous>, transform_indices = @transform_8, window_bounds = array<i64: 1, 2>}, {transform_indices = @transform_9, window_bounds = array<i64: 8, 2>}]} {
    %c0 = arith.constant 0 : index
    %c0_0 = arith.constant 0 : index
    %0 = vector.load %arg1[%c0, %c0_0] : memref<8x8xf32, #tpu.memory_space<vmem>>, vector<8x8xf32>
    %c0_1 = arith.constant 0 : index
    %c0_2 = arith.constant 0 : index
    %1 = vector.load %arg2[%c0_1, %c0_2] : memref<8x4xf32, #tpu.memory_space<vmem>>, vector<8x4xf32>
    %c0_3 = arith.constant 0 : index
    %c0_4 = arith.constant 0 : index
    %2 = vector.load %arg3[%c0_3, %c0_4] : memref<8x64xf32, #tpu.memory_space<vmem>>, vector<8x64xf32>
    %cst = arith.constant dense<0.000000e+00> : vector<8x64xf32>
    %3 = tpu.matmul %0, %2, %cst {dimension_numbers = #tpu.dot_dimension_numbers<[1], [0], [0], [1], [0, 0, 1, 1], [], []>} : vector<8x8xf32>, vector<8x64xf32>, vector<8x64xf32> -> vector<8x64xf32>
    %c0_5 = arith.constant 0 : index
    %c0_6 = arith.constant 0 : index
    %4 = vector.load %arg4[%c0_5, %c0_6] : memref<4x64xf32, #tpu.memory_space<vmem>>, vector<4x64xf32>
    %cst_7 = arith.constant dense<0.000000e+00> : vector<8x64xf32>
    %5 = tpu.matmul %1, %4, %cst_7 {dimension_numbers = #tpu.dot_dimension_numbers<[1], [0], [0], [1], [0, 0, 1, 1], [], []>} : vector<8x4xf32>, vector<4x64xf32>, vector<8x64xf32> -> vector<8x64xf32>
    %6 = arith.addf %3, %5 : vector<8x64xf32>
    %c0_8 = arith.constant 0 : index
    %c0_9 = arith.constant 0 : index
    %7 = vector.load %arg5[%c0_8, %c0_9] : memref<1x64xf32, #tpu.memory_space<vmem>>, vector<1x64xf32>
    %8 = vector.broadcast %7 : vector<1x64xf32> to vector<8x64xf32>
    %9 = arith.addf %6, %8 : vector<8x64xf32>
    %cst_10 = arith.constant 0.000000e+00 : f32
    %10 = vector.broadcast %cst_10 : f32 to vector<8x64xf32>
    %11 = arith.maximumf %9, %10 : vector<8x64xf32>
    %c0_11 = arith.constant 0 : index
    %c0_12 = arith.constant 0 : index
    %12 = vector.load %arg6[%c0_11, %c0_12] : memref<64x64xf32, #tpu.memory_space<vmem>>, vector<64x64xf32>
    %cst_13 = arith.constant dense<0.000000e+00> : vector<8x64xf32>
    %13 = tpu.matmul %11, %12, %cst_13 {dimension_numbers = #tpu.dot_dimension_numbers<[1], [0], [0], [1], [0, 0, 1, 1], [], []>} : vector<8x64xf32>, vector<64x64xf32>, vector<8x64xf32> -> vector<8x64xf32>
    %c0_14 = arith.constant 0 : index
    %c0_15 = arith.constant 0 : index
    %14 = vector.load %arg7[%c0_14, %c0_15] : memref<1x64xf32, #tpu.memory_space<vmem>>, vector<1x64xf32>
    %15 = vector.broadcast %14 : vector<1x64xf32> to vector<8x64xf32>
    %16 = arith.addf %13, %15 : vector<8x64xf32>
    %cst_16 = arith.constant 0.000000e+00 : f32
    %17 = vector.broadcast %cst_16 : f32 to vector<8x64xf32>
    %18 = arith.maximumf %16, %17 : vector<8x64xf32>
    %c0_17 = arith.constant 0 : index
    %c0_18 = arith.constant 0 : index
    %19 = vector.load %arg8[%c0_17, %c0_18] : memref<64x2xf32, #tpu.memory_space<vmem>>, vector<64x2xf32>
    %cst_19 = arith.constant dense<0.000000e+00> : vector<8x2xf32>
    %20 = tpu.matmul %18, %19, %cst_19 {dimension_numbers = #tpu.dot_dimension_numbers<[1], [0], [0], [1], [0, 0, 1, 1], [], []>} : vector<8x64xf32>, vector<64x2xf32>, vector<8x2xf32> -> vector<8x2xf32>
    %c0_20 = arith.constant 0 : index
    %c0_21 = arith.constant 0 : index
    %21 = vector.load %arg9[%c0_20, %c0_21] : memref<1x2xf32, #tpu.memory_space<vmem>>, vector<1x2xf32>
    %22 = vector.broadcast %21 : vector<1x2xf32> to vector<8x2xf32>
    %23 = arith.addf %20, %22 : vector<8x2xf32>
    %c0_22 = arith.constant 0 : index
    %c0_23 = arith.constant 0 : index
    %24 = vector.load %arg10[%c0_22, %c0_23] : memref<8x2xf32, #tpu.memory_space<vmem>>, vector<8x2xf32>
    tpu.vector_store %arg10[%c0_22, %c0_23], %23 {strides = array<i32>} : memref<8x2xf32, #tpu.memory_space<vmem>>, vector<8x2xf32>,
    return
  }
  func.func @transform_0(%arg0: i32) -> (i32, i32) {
    %c0_i32 = arith.constant 0 : i32
    %c0_i32_0 = arith.constant 0 : i32
    return %arg0, %c0_i32 : i32, i32
  }
  func.func @transform_1(%arg0: i32) -> (i32, i32) {
    %c0_i32 = arith.constant 0 : i32
    %c0_i32_0 = arith.constant 0 : i32
    return %arg0, %c0_i32 : i32, i32
  }
  func.func @transform_2(%arg0: i32) -> (i32, i32) {
    %c0_i32 = arith.constant 0 : i32
    %c0_i32_0 = arith.constant 0 : i32
    %c0_i32_1 = arith.constant 0 : i32
    return %c0_i32, %c0_i32_0 : i32, i32
  }
  func.func @transform_3(%arg0: i32) -> (i32, i32) {
    %c0_i32 = arith.constant 0 : i32
    %c0_i32_0 = arith.constant 0 : i32
    %c0_i32_1 = arith.constant 0 : i32
    return %c0_i32, %c0_i32_0 : i32, i32
  }
  func.func @transform_4(%arg0: i32) -> (i32, i32) {
    %c0_i32 = arith.constant 0 : i32
    %c0_i32_0 = arith.constant 0 : i32
    %c0_i32_1 = arith.constant 0 : i32
    return %c0_i32, %c0_i32_0 : i32, i32
  }
  func.func @transform_5(%arg0: i32) -> (i32, i32) {
    %c0_i32 = arith.constant 0 : i32
    %c0_i32_0 = arith.constant 0 : i32
    %c0_i32_1 = arith.constant 0 : i32
    return %c0_i32, %c0_i32_0 : i32, i32
  }
  func.func @transform_6(%arg0: i32) -> (i32, i32) {
    %c0_i32 = arith.constant 0 : i32
    %c0_i32_0 = arith.constant 0 : i32
    %c0_i32_1 = arith.constant 0 : i32
    return %c0_i32, %c0_i32_0 : i32, i32
  }
  func.func @transform_7(%arg0: i32) -> (i32, i32) {
    %c0_i32 = arith.constant 0 : i32
    %c0_i32_0 = arith.constant 0 : i32
    %c0_i32_1 = arith.constant 0 : i32
    return %c0_i32, %c0_i32_0 : i32, i32
  }
  func.func @transform_8(%arg0: i32) -> (i32, i32) {
    %c0_i32 = arith.constant 0 : i32
    %c0_i32_0 = arith.constant 0 : i32
    %c0_i32_1 = arith.constant 0 : i32
    return %c0_i32, %c0_i32_0 : i32, i32
  }
  func.func @transform_9(%arg0: i32) -> (i32, i32) {
    %c0_i32 = arith.constant 0 : i32
    %c0_i32_0 = arith.constant 0 : i32
    return %arg0, %c0_i32 : i32, i32
  }
}

</mosaic_0001>

<llo_original>
// kernel: tpu_custom_call.1
$region0: #{tpu_custom_call.1}
  #allocation0 [shape = 'u32[]', space=smem, size = 0x4, offset = 0x4, fixed_abs, tag = 'smem constant byte address 0x4 - core index']
  #allocation1 [shape = 'u32[72,128]{1,0:T(1,128)}', space=vmem, size = 0x9000, scoped, tag = 'internal scratch']
  %s0 = inlined_call_operand.vmem [shape: f32[8,8], index: 0, kind: input, shape index: {}]
  %s1 = inlined_call_operand.vmem [shape: f32[8,4], index: 1, kind: input, shape index: {}]
  %s2 = inlined_call_operand.hbm [shape: f32[8,64], index: 2, kind: input, shape index: {}]
  %s3 = inlined_call_operand.vmem [shape: f32[4,64], index: 3, kind: input, shape index: {}]
  %s4 = inlined_call_operand.vmem [shape: f32[1,64], index: 4, kind: input, shape index: {}]
  %s5 = inlined_call_operand.vmem [shape: f32[64,64], index: 5, kind: input, shape index: {}]
  %s6 = inlined_call_operand.vmem [shape: f32[1,64], index: 6, kind: input, shape index: {}]
  %s7 = inlined_call_operand.vmem [shape: f32[64,2], index: 7, kind: input, shape index: {}]
  %s8 = inlined_call_operand.vmem [shape: f32[1,2], index: 8, kind: input, shape index: {}]
  %s9 = inlined_call_operand.vmem [shape: f32[8,2], index: 9, kind: output, shape index: {}]
  %s10 = sld [smem:[#allocation0]]
  $region50: #{tpu_custom_call.1} parent=0
    _
  %s12 = ssub.s32 1, %s10
  %s13 = scalar_select 0, %s12, %s10
  $region1: #{tpu_custom_call.1} parent=0
    #allocation2 [shape = 'u8[4096]{0}', space=vmem, size = 0x1000, scoped, tag = 'input window, operand 2, single buffered']
    #allocation3 [shape = 's32[1]{0}', space=sflag, size = 0x4, scoped, tag = 'scoped memory for tpu_custom_call.1']
    %14 = vsyncpa [#allocation3], 0
    // Predicated region
    $region2: #{tpu_custom_call.1} parent=1 // pred_check
      _
    $region3: #{tpu_custom_call.1} parent=1 // pred_check_branch
      %16 = sbr.rel (0) target = $region5
    $region4: #{tpu_custom_call.1} parent=1 // pred_region
      _
    $region5: #{tpu_custom_call.1} parent=1 // pred_fallthru
      _
    // Predicated region
    $region6: #{tpu_custom_call.1} parent=1 // pred_check
      _
    $region7: #{tpu_custom_call.1} parent=1 // pred_check_branch
      %18 = sbr.rel (0) target = $region9
    $region8: #{tpu_custom_call.1} parent=1 // pred_region
      _
    $region9: #{tpu_custom_call.1} parent=1 // pred_fallthru
      _
    // Predicated region
    $region10: #{tpu_custom_call.1} parent=1 // pred_check
      _
    $region11: #{tpu_custom_call.1} parent=1 // pred_check_branch
      %20 = sbr.rel (0) target = $region13
    $region12: #{tpu_custom_call.1} parent=1 // pred_region
      %22 = vsyncadd [#allocation3], 0
      %s24 = sshll.u32 %s2, 4
      %s25 = int_to_ptr.hbm [resolvable:$true] %s24
      %s26 = sshll.u32 [#allocation2], 4
      %s27 = int_to_ptr.vmem [resolvable:$true] %s26
      %29 = dma.hbm_to_vmem [thread:$0]  %s25, 128, %s27, [#allocation3]
    $region13: #{tpu_custom_call.1} parent=1 // pred_fallthru
      _
    // Predicated region
    $region14: #{tpu_custom_call.1} parent=1 // pred_check
      _
    $region15: #{tpu_custom_call.1} parent=1 // pred_check_branch
      %31 = sbr.rel (0) target = $region17
    $region16: #{tpu_custom_call.1} parent=1 // pred_region
      _
    $region17: #{tpu_custom_call.1} parent=1 // pred_fallthru
      _
    // Predicated region
    $region18: #{tpu_custom_call.1} parent=1 // pred_check
      _
    $region19: #{tpu_custom_call.1} parent=1 // pred_check_branch
      %33 = sbr.rel (0) target = $region21
    $region20: #{tpu_custom_call.1} parent=1 // pred_region
      _
    $region21: #{tpu_custom_call.1} parent=1 // pred_fallthru
      _
    // Predicated region
    $region22: #{tpu_custom_call.1} parent=1 // pred_check
      _
    $region23: #{tpu_custom_call.1} parent=1 // pred_check_branch
      %35 = sbr.rel (0) target = $region25
    $region24: #{tpu_custom_call.1} parent=1 // pred_region
      _
    $region25: #{tpu_custom_call.1} parent=1 // pred_fallthru
      _
    // Predicated region
    $region26: #{tpu_custom_call.1} parent=1 // pred_check
      _
    $region27: #{tpu_custom_call.1} parent=1 // pred_check_branch
      %37 = sbr.rel (0) target = $region29
    $region28: #{tpu_custom_call.1} parent=1 // pred_region
      _
    $region29: #{tpu_custom_call.1} parent=1 // pred_fallthru
      _
    // Predicated region
    $region30: #{tpu_custom_call.1} parent=1 // pred_check
      _
    $region31: #{tpu_custom_call.1} parent=1 // pred_check_branch
      %39 = sbr.rel (0) target = $region33
    $region32: #{tpu_custom_call.1} parent=1 // pred_region
      _
    $region33: #{tpu_custom_call.1} parent=1 // pred_fallthru
      _
    // Predicated region
    $region34: #{tpu_custom_call.1} parent=1 // pred_check
      _
    $region35: #{tpu_custom_call.1} parent=1 // pred_check_branch
      %41 = sbr.rel (0) target = $region37
    $region36: #{tpu_custom_call.1} parent=1 // pred_region
      _
    $region37: #{tpu_custom_call.1} parent=1 // pred_fallthru
      _
    // Predicated region
    $region38: #{tpu_custom_call.1} parent=1 // pred_check
      _
    $region39: #{tpu_custom_call.1} parent=1 // pred_check_branch
      %43 = sbr.rel (0) target = $region41
    $region40: #{tpu_custom_call.1} parent=1 // pred_region
      %45 = dma.done [#allocation3], 128
    $region41: #{tpu_custom_call.1} parent=1 // pred_fallthru
      _
    %v46 = vld [vmem:[%s0] sm:$0xff]
    %v47 = vld [vmem:[%s1] sm:$0xff]
    %v48 = vld [vmem:[#allocation2] sm:$0xff]
    %v49 = vld [vmem:[%s3] sm:$0xf]
    %vm50 = vcmask 31744
    %v52 = vsel %vm50, %v47, 0
    %vm54 = vcmask 1043456
    %v56 = vsel %vm54, %v49, 0
    %58 = vmatpush.msra.mxu0 0.0
    %59 = vmatpush.msra.mxu0 0.0
    %60 = vmatpush.msra.mxu0 0.0
    %61 = vmatpush.msra.mxu0 0.0
    %62 = vmatpush.msra.mxu0 0.0
    %63 = vmatpush.msra.mxu0 0.0
    %64 = vmatpush.msra.mxu0 0.0
    %65 = vmatpush.msra.mxu0 0.0
    %66 = vmatpush.msra.mxu0 0.0
    %67 = vmatpush.msra.mxu0 0.0
    %68 = vmatpush.msra.mxu0 0.0
    %69 = vmatpush.msra.mxu0 0.0
    %70 = vmatpush.msra.mxu0 0.0
    %71 = vmatpush.msra.mxu0 0.0
    %72 = vmatpush.msra.mxu0 0.0
    %73 = vmatpush.msra.mxu0 %v56
    %74 = vmatmul.f32.gmra.mxu0 %v52
    %v75 = vpop.f32.mrf.mxu0
    %v76 = vadd.f32 0.0, %v75
    %77 = vdwg.mxu0
    %vm78 = vcmask 64512
    %v80 = vsel %vm78, %v46, 0
    %82 = vmatpush.msra.mxu0 0.0
    %83 = vmatpush.msra.mxu0 0.0
    %84 = vmatpush.msra.mxu0 0.0
    %85 = vmatpush.msra.mxu0 0.0
    %86 = vmatpush.msra.mxu0 0.0
    %87 = vmatpush.msra.mxu0 0.0
    %88 = vmatpush.msra.mxu0 0.0
    %89 = vmatpush.msra.mxu0 0.0
    %90 = vmatpush.msra.mxu0 0.0
    %91 = vmatpush.msra.mxu0 0.0
    %92 = vmatpush.msra.mxu0 0.0
    %93 = vmatpush.msra.mxu0 0.0
    %94 = vmatpush.msra.mxu0 0.0
    %95 = vmatpush.msra.mxu0 0.0
    %96 = vmatpush.msra.mxu0 0.0
    %97 = vmatpush.msra.mxu0 %v48
    %98 = vmatmul.f32.gmra.mxu0 %v80
    %v99 = vpop.f32.mrf.mxu0
    %v100 = vadd.f32 %v76, %v99
    %101 = vdwg.mxu0
    %v102 = vld [vmem:[%s4] sm:$0x1]
    %v104 = vperm.slane %v102, 0
    %v106 = vadd.f32 %v100, %v104
    %v107 = vmax.f32 %v106, 0.0
    %v108 = vld [vmem:[%s5] sm:$0xff]
    %v109 = vld [vmem:[%s5 + $0x8] sm:$0xff]
    %v110 = vld [vmem:[%s5 + $0x10] sm:$0xff]
    %v111 = vld [vmem:[%s5 + $0x18] sm:$0xff]
    %v112 = vld [vmem:[%s5 + $0x20] sm:$0xff]
    %v113 = vld [vmem:[%s5 + $0x28] sm:$0xff]
    %v114 = vld [vmem:[%s5 + $0x30] sm:$0xff]
    %v115 = vld [vmem:[%s5 + $0x38] sm:$0xff]
    %v116 = vld [vmem:[%s6] sm:$0x1]
    %v118 = vperm.slane %v116, 0
    %vm120 = vcmask 523264
    %v122 = vsel %vm120, %v107, 0
    %124 = vmatpush.msra.mxu0 0.0
    %125 = vmatpush.msra.mxu0 0.0
    %126 = vmatpush.msra.mxu0 0.0
    %127 = vmatpush.msra.mxu0 0.0
    %128 = vmatpush.msra.mxu0 0.0
    %129 = vmatpush.msra.mxu0 0.0
    %130 = vmatpush.msra.mxu0 0.0
    %131 = vmatpush.msra.mxu0 0.0
    %132 = vmatpush.msra.mxu0 %v115
    %133 = vmatpush.msra.mxu0 %v114
    %134 = vmatpush.msra.mxu0 %v113
    %135 = vmatpush.msra.mxu0 %v112
    %136 = vmatpush.msra.mxu0 %v111
    %137 = vmatpush.msra.mxu0 %v110
    %138 = vmatpush.msra.mxu0 %v109
    %139 = vmatpush.msra.mxu0 %v108
    %140 = vmatmul.f32.gmra.mxu0 %v122
    %v141 = vpop.f32.mrf.mxu0
    %v142 = vadd.f32 %v118, %v141
    %143 = vdwg.mxu0
    %v144 = vmax.f32 %v142, 0.0
    %v145 = vld [vmem:[%s7] sm:$0xff]
    %v146 = vld [vmem:[%s7 + $0x8] sm:$0xff]
    %v147 = vld [vmem:[%s7 + $0x10] sm:$0xff]
    %v148 = vld [vmem:[%s7 + $0x18] sm:$0xff]
    %v149 = vld [vmem:[%s7 + $0x20] sm:$0xff]
    %v150 = vld [vmem:[%s7 + $0x28] sm:$0xff]
    %v151 = vld [vmem:[%s7 + $0x30] sm:$0xff]
    %v152 = vld [vmem:[%s7 + $0x38] sm:$0xff]
    %v153 = vld [vmem:[%s8] sm:$0x1]
    %v155 = vperm.slane %v153, 0
    %v158 = vsel %vm120, %v144, 0
    %160 = vmatpush.msra.mxu0 0.0
    %161 = vmatpush.msra.mxu0 0.0
    %162 = vmatpush.msra.mxu0 0.0
    %163 = vmatpush.msra.mxu0 0.0
    %164 = vmatpush.msra.mxu0 0.0
    %165 = vmatpush.msra.mxu0 0.0
    %166 = vmatpush.msra.mxu0 0.0
    %167 = vmatpush.msra.mxu0 0.0
    %168 = vmatpush.msra.mxu0 %v152
    %169 = vmatpush.msra.mxu0 %v151
    %170 = vmatpush.msra.mxu0 %v150
    %171 = vmatpush.msra.mxu0 %v149
    %172 = vmatpush.msra.mxu0 %v148
    %173 = vmatpush.msra.mxu0 %v147
    %174 = vmatpush.msra.mxu0 %v146
    %175 = vmatpush.msra.mxu0 %v145
    %176 = vmatmul.f32.gmra.mxu0 %v158
    %v177 = vpop.f32.mrf.mxu0
    %v178 = vadd.f32 %v155, %v177
    %179 = vdwg.mxu0
    %vm180 = vcmask 15360
    %181 = vst.msk [vmem:[%s9] sm:$0xff] %vm180, %v178
    // Predicated region
    $region42: #{tpu_custom_call.1} parent=1 // pred_check
      _
    $region43: #{tpu_custom_call.1} parent=1 // pred_check_branch
      %183 = sbr.rel (0) target = $region45
    $region44: #{tpu_custom_call.1} parent=1 // pred_region
      _
    $region45: #{tpu_custom_call.1} parent=1 // pred_fallthru
      _
    // Predicated region
    $region46: #{tpu_custom_call.1} parent=1 // pred_check
      _
    $region47: #{tpu_custom_call.1} parent=1 // pred_check_branch
      %185 = sbr.rel (0) target = $region49
    $region48: #{tpu_custom_call.1} parent=1 // pred_region
      _
    $region49: #{tpu_custom_call.1} parent=1 // pred_fallthru
      _
    %186 = vsyncpa [#allocation3], 1

// kernel: tpu_custom_call.1
$region0: #{tpu_custom_call.1}
  #allocation0 [shape = 'u32[]', space=smem, size = 0x4, offset = 0x4, fixed_abs, tag = 'smem constant byte address 0x4 - core index']
  #allocation1 [shape = 'u32[72,128]{1,0:T(1,128)}', space=vmem, size = 0x9000, scoped, tag = 'internal scratch']
  %s0 = inlined_call_operand.vmem [shape: f32[8,8], index: 0, kind: input, shape index: {}]
  %s1 = inlined_call_operand.vmem [shape: f32[8,4], index: 1, kind: input, shape index: {}]
  %s2 = inlined_call_operand.hbm [shape: f32[8,64], index: 2, kind: input, shape index: {}]
  %s3 = inlined_call_operand.vmem [shape: f32[4,64], index: 3, kind: input, shape index: {}]
  %s4 = inlined_call_operand.vmem [shape: f32[1,64], index: 4, kind: input, shape index: {}]
  %s5 = inlined_call_operand.vmem [shape: f32[64,64], index: 5, kind: input, shape index: {}]
  %s6 = inlined_call_operand.vmem [shape: f32[1,64], index: 6, kind: input, shape index: {}]
  %s7 = inlined_call_operand.vmem [shape: f32[64,2], index: 7, kind: input, shape index: {}]
  %s8 = inlined_call_operand.vmem [shape: f32[1,2], index: 8, kind: input, shape index: {}]
  %s9 = inlined_call_operand.vmem [shape: f32[8,2], index: 9, kind: output, shape index: {}]
  %s10 = sld [smem:[#allocation0]]
  $region50: #{tpu_custom_call.1} parent=0
    _
  %s12 = ssub.s32 1, %s10
  %s13 = scalar_select 0, %s12, %s10
  $region1: #{tpu_custom_call.1} parent=0
    #allocation2 [shape = 'u8[4096]{0}', space=vmem, size = 0x1000, scoped, tag = 'input window, operand 2, single buffered']
    #allocation3 [shape = 's32[1]{0}', space=sflag, size = 0x4, scoped, tag = 'scoped memory for tpu_custom_call.1']
    %14 = vsyncpa [#allocation3], 0
    // Predicated region
    $region2: #{tpu_custom_call.1} parent=1 // pred_check
      _
    $region3: #{tpu_custom_call.1} parent=1 // pred_check_branch
      %16 = sbr.rel (0) target = $region5
    $region4: #{tpu_custom_call.1} parent=1 // pred_region
      _
    $region5: #{tpu_custom_call.1} parent=1 // pred_fallthru
      _
    // Predicated region
    $region6: #{tpu_custom_call.1} parent=1 // pred_check
      _
    $region7: #{tpu_custom_call.1} parent=1 // pred_check_branch
      %18 = sbr.rel (0) target = $region9
    $region8: #{tpu_custom_call.1} parent=1 // pred_region
      _
    $region9: #{tpu_custom_call.1} parent=1 // pred_fallthru
      _
    // Predicated region
    $region10: #{tpu_custom_call.1} parent=1 // pred_check
      _
    $region11: #{tpu_custom_call.1} parent=1 // pred_check_branch
      %20 = sbr.rel (0) target = $region13
    $region12: #{tpu_custom_call.1} parent=1 // pred_region
      %22 = vsyncadd [#allocation3], 0
      %s24 = sshll.u32 %s2, 4
      %s25 = int_to_ptr.hbm [resolvable:$true] %s24
      %s26 = sshll.u32 [#allocation2], 4
      %s27 = int_to_ptr.vmem [resolvable:$true] %s26
      %29 = dma.hbm_to_vmem [thread:$0]  %s25, 128, %s27, [#allocation3]
    $region13: #{tpu_custom_call.1} parent=1 // pred_fallthru
      _
    // Predicated region
    $region14: #{tpu_custom_call.1} parent=1 // pred_check
      _
    $region15: #{tpu_custom_call.1} parent=1 // pred_check_branch
      %31 = sbr.rel (0) target = $region17
    $region16: #{tpu_custom_call.1} parent=1 // pred_region
      _
    $region17: #{tpu_custom_call.1} parent=1 // pred_fallthru
      _
    // Predicated region
    $region18: #{tpu_custom_call.1} parent=1 // pred_check
      _
    $region19: #{tpu_custom_call.1} parent=1 // pred_check_branch
      %33 = sbr.rel (0) target = $region21
    $region20: #{tpu_custom_call.1} parent=1 // pred_region
      _
    $region21: #{tpu_custom_call.1} parent=1 // pred_fallthru
      _
    // Predicated region
    $region22: #{tpu_custom_call.1} parent=1 // pred_check
      _
    $region23: #{tpu_custom_call.1} parent=1 // pred_check_branch
      %35 = sbr.rel (0) target = $region25
    $region24: #{tpu_custom_call.1} parent=1 // pred_region
      _
    $region25: #{tpu_custom_call.1} parent=1 // pred_fallthru
      _
    // Predicated region
    $region26: #{tpu_custom_call.1} parent=1 // pred_check
      _
    $region27: #{tpu_custom_call.1} parent=1 // pred_check_branch
      %37 = sbr.rel (0) target = $region29
    $region28: #{tpu_custom_call.1} parent=1 // pred_region
      _
    $region29: #{tpu_custom_call.1} parent=1 // pred_fallthru
      _
    // Predicated region
    $region30: #{tpu_custom_call.1} parent=1 // pred_check
      _
    $region31: #{tpu_custom_call.1} parent=1 // pred_check_branch
      %39 = sbr.rel (0) target = $region33
    $region32: #{tpu_custom_call.1} parent=1 // pred_region
      _
    $region33: #{tpu_custom_call.1} parent=1 // pred_fallthru
      _
    // Predicated region
    $region34: #{tpu_custom_call.1} parent=1 // pred_check
      _
    $region35: #{tpu_custom_call.1} parent=1 // pred_check_branch
      %41 = sbr.rel (0) target = $region37
    $region36: #{tpu_custom_call.1} parent=1 // pred_region
      _
    $region37: #{tpu_custom_call.1} parent=1 // pred_fallthru
      _
    // Predicated region
    $region38: #{tpu_custom_call.1} parent=1 // pred_check
      _
    $region39: #{tpu_custom_call.1} parent=1 // pred_check_branch
      %43 = sbr.rel (0) target = $region41
    $region40: #{tpu_custom_call.1} parent=1 // pred_region
      %45 = dma.done [#allocation3], 128
    $region41: #{tpu_custom_call.1} parent=1 // pred_fallthru
      _
    %v46 = vld [vmem:[%s0] sm:$0xff]
    %v47 = vld [vmem:[%s1] sm:$0xff]
    %v48 = vld [vmem:[#allocation2] sm:$0xff]
    %v49 = vld [vmem:[%s3] sm:$0xf]
    %vm50 = vcmask 31744
    %v52 = vsel %vm50, %v47, 0
    %vm54 = vcmask 1043456
    %v56 = vsel %vm54, %v49, 0
    %58 = vmatpush.msra.mxu0 0.0
    %59 = vmatpush.msra.mxu0 0.0
    %60 = vmatpush.msra.mxu0 0.0
    %61 = vmatpush.msra.mxu0 0.0
    %62 = vmatpush.msra.mxu0 0.0
    %63 = vmatpush.msra.mxu0 0.0
    %64 = vmatpush.msra.mxu0 0.0
    %65 = vmatpush.msra.mxu0 0.0
    %66 = vmatpush.msra.mxu0 0.0
    %67 = vmatpush.msra.mxu0 0.0
    %68 = vmatpush.msra.mxu0 0.0
    %69 = vmatpush.msra.mxu0 0.0
    %70 = vmatpush.msra.mxu0 0.0
    %71 = vmatpush.msra.mxu0 0.0
    %72 = vmatpush.msra.mxu0 0.0
    %73 = vmatpush.msra.mxu0 %v56
    %74 = vmatmul.f32.gmra.mxu0 %v52
    %v75 = vpop.f32.mrf.mxu0
    %v76 = vadd.f32 0.0, %v75
    %77 = vdwg.mxu0
    %vm78 = vcmask 64512
    %v80 = vsel %vm78, %v46, 0
    %82 = vmatpush.msra.mxu0 0.0
    %83 = vmatpush.msra.mxu0 0.0
    %84 = vmatpush.msra.mxu0 0.0
    %85 = vmatpush.msra.mxu0 0.0
    %86 = vmatpush.msra.mxu0 0.0
    %87 = vmatpush.msra.mxu0 0.0
    %88 = vmatpush.msra.mxu0 0.0
    %89 = vmatpush.msra.mxu0 0.0
    %90 = vmatpush.msra.mxu0 0.0
    %91 = vmatpush.msra.mxu0 0.0
    %92 = vmatpush.msra.mxu0 0.0
    %93 = vmatpush.msra.mxu0 0.0
    %94 = vmatpush.msra.mxu0 0.0
    %95 = vmatpush.msra.mxu0 0.0
    %96 = vmatpush.msra.mxu0 0.0
    %97 = vmatpush.msra.mxu0 %v48
    %98 = vmatmul.f32.gmra.mxu0 %v80
    %v99 = vpop.f32.mrf.mxu0
    %v100 = vadd.f32 %v76, %v99
    %101 = vdwg.mxu0
    %v102 = vld [vmem:[%s4] sm:$0x1]
    %v104 = vperm.slane %v102, 0
    %v106 = vadd.f32 %v100, %v104
    %v107 = vmax.f32 %v106, 0.0
    %v108 = vld [vmem:[%s5] sm:$0xff]
    %v109 = vld [vmem:[%s5 + $0x8] sm:$0xff]
    %v110 = vld [vmem:[%s5 + $0x10] sm:$0xff]
    %v111 = vld [vmem:[%s5 + $0x18] sm:$0xff]
    %v112 = vld [vmem:[%s5 + $0x20] sm:$0xff]
    %v113 = vld [vmem:[%s5 + $0x28] sm:$0xff]
    %v114 = vld [vmem:[%s5 + $0x30] sm:$0xff]
    %v115 = vld [vmem:[%s5 + $0x38] sm:$0xff]
    %v116 = vld [vmem:[%s6] sm:$0x1]
    %v118 = vperm.slane %v116, 0
    %vm120 = vcmask 523264
    %v122 = vsel %vm120, %v107, 0
    %124 = vmatpush.msra.mxu0 0.0
    %125 = vmatpush.msra.mxu0 0.0
    %126 = vmatpush.msra.mxu0 0.0
    %127 = vmatpush.msra.mxu0 0.0
    %128 = vmatpush.msra.mxu0 0.0
    %129 = vmatpush.msra.mxu0 0.0
    %130 = vmatpush.msra.mxu0 0.0
    %131 = vmatpush.msra.mxu0 0.0
    %132 = vmatpush.msra.mxu0 %v115
    %133 = vmatpush.msra.mxu0 %v114
    %134 = vmatpush.msra.mxu0 %v113
    %135 = vmatpush.msra.mxu0 %v112
    %136 = vmatpush.msra.mxu0 %v111
    %137 = vmatpush.msra.mxu0 %v110
    %138 = vmatpush.msra.mxu0 %v109
    %139 = vmatpush.msra.mxu0 %v108
    %140 = vmatmul.f32.gmra.mxu0 %v122
    %v141 = vpop.f32.mrf.mxu0
    %v142 = vadd.f32 %v118, %v141
    %143 = vdwg.mxu0
    %v144 = vmax.f32 %v142, 0.0
    %v145 = vld [vmem:[%s7] sm:$0xff]
    %v146 = vld [vmem:[%s7 + $0x8] sm:$0xff]
    %v147 = vld [vmem:[%s7 + $0x10] sm:$0xff]
    %v148 = vld [vmem:[%s7 + $0x18] sm:$0xff]
    %v149 = vld [vmem:[%s7 + $0x20] sm:$0xff]
    %v150 = vld [vmem:[%s7 + $0x28] sm:$0xff]
    %v151 = vld [vmem:[%s7 + $0x30] sm:$0xff]
    %v152 = vld [vmem:[%s7 + $0x38] sm:$0xff]
    %v153 = vld [vmem:[%s8] sm:$0x1]
    %v155 = vperm.slane %v153, 0
    %v158 = vsel %vm120, %v144, 0
    %160 = vmatpush.msra.mxu0 0.0
    %161 = vmatpush.msra.mxu0 0.0
    %162 = vmatpush.msra.mxu0 0.0
    %163 = vmatpush.msra.mxu0 0.0
    %164 = vmatpush.msra.mxu0 0.0
    %165 = vmatpush.msra.mxu0 0.0
    %166 = vmatpush.msra.mxu0 0.0
    %167 = vmatpush.msra.mxu0 0.0
    %168 = vmatpush.msra.mxu0 %v152
    %169 = vmatpush.msra.mxu0 %v151
    %170 = vmatpush.msra.mxu0 %v150
    %171 = vmatpush.msra.mxu0 %v149
    %172 = vmatpush.msra.mxu0 %v148
    %173 = vmatpush.msra.mxu0 %v147
    %174 = vmatpush.msra.mxu0 %v146
    %175 = vmatpush.msra.mxu0 %v145
    %176 = vmatmul.f32.gmra.mxu0 %v158
    %v177 = vpop.f32.mrf.mxu0
    %v178 = vadd.f32 %v155, %v177
    %179 = vdwg.mxu0
    %vm180 = vcmask 15360
    %181 = vst.msk [vmem:[%s9] sm:$0xff] %vm180, %v178
    // Predicated region
    $region42: #{tpu_custom_call.1} parent=1 // pred_check
      _
    $region43: #{tpu_custom_call.1} parent=1 // pred_check_branch
      %183 = sbr.rel (0) target = $region45
    $region44: #{tpu_custom_call.1} parent=1 // pred_region
      _
    $region45: #{tpu_custom_call.1} parent=1 // pred_fallthru
      _
    // Predicated region
    $region46: #{tpu_custom_call.1} parent=1 // pred_check
      _
    $region47: #{tpu_custom_call.1} parent=1 // pred_check_branch
      %185 = sbr.rel (0) target = $region49
    $region48: #{tpu_custom_call.1} parent=1 // pred_region
      _
    $region49: #{tpu_custom_call.1} parent=1 // pred_fallthru
      _
    %186 = vsyncpa [#allocation3], 1

</llo_original>
